<compile_context>
chip_gen: v6e
topology: v6e:2x2x1
jax: 0.10.0
libtpu: 0.0.40
codegen_flags: <defaults>
</compile_context>

<pallas_src>
import jax
import jax.numpy as jnp
from jax.experimental import pallas as pl
from jax.experimental.pallas import tpu as pltpu


# ---------------------------------------------------------------------------
# Helpers
# ---------------------------------------------------------------------------
def _round_up(n, m):
    return ((n + m - 1) // m) * m


# ---------------------------------------------------------------------------
# Fused Pallas kernel
# ---------------------------------------------------------------------------
def _make_mlp_kernel(num_linear, compute_dtype):
    """Kernel ref layout: (x_ref, w0, b0, ..., w{L-1}, b{L-1}, o_ref, act_ref).

    Weights are pre-transposed to (Din_pad, Dout_pad) in `compute_dtype`
    (bf16); biases are (1, Dout_pad) f32. ReLU after every layer but the last
    (matches nn.Sequential built by the PyTorch module).
    """
    def kernel(x_ref, *refs):
        act_ref = refs[-1]                 # VMEM staging for hidden activations
        o_ref = refs[-2]
        wb = refs[:-2]
        h = x_ref[...]                     # (TILE_B, D0_pad) f32
        for i in range(num_linear):
            w = wb[2 * i][...]             # (Din_pad, Dout_pad) bf16
            b = wb[2 * i + 1][...]         # (1, Dout_pad) f32
            # bf16 MXU operands, f32 accumulation; epilogue stays f32.
            h = jnp.dot(h.astype(compute_dtype), w,
                        preferred_element_type=jnp.float32) + b
            if i < num_linear - 1:
                h = jnp.maximum(h, 0.0)    # ReLU (hidden layers only)
                dout = w.shape[1]
                # Stage through VMEM scratch so the live activation does not
                # pin vregs across the whole unrolled layer chain.
                act_ref[:, :dout] = h
                h = act_ref[:, :dout]
        o_ref[...] = h                     # full, lane-dense (8,128) tile store
    return kernel


# ---------------------------------------------------------------------------
# Wrappers
# ---------------------------------------------------------------------------
def prepare_params(params, *, weight_dtype=jnp.bfloat16, lane_multiple=128):
    """params: list of (W (Dout, Din), b (Dout,)) in PyTorch layout.

    Returns list of (W^T zero-padded to (Din_pad, Dout_pad) in `weight_dtype`,
    b as (1, Dout_pad) f32). Use lane_multiple=256 on v6e/v7x when the real
    dims are large enough to fill the 256x256 MXU; 128 is optimal on v5e and
    avoids padding inflation at small dims.
    """
    prepared = []
    for w, b in params:
        dout, din = w.shape
        din_p = _round_up(din, lane_multiple)
        dout_p = _round_up(dout, lane_multiple)
        w_t = (jnp.zeros((din_p, dout_p), weight_dtype)
               .at[:din, :dout].set(w.T.astype(weight_dtype)))
        b_p = (jnp.zeros((1, dout_p), jnp.float32)
               .at[0, :dout].set(b.astype(jnp.float32)))
        prepared.append((w_t, b_p))
    return prepared


def mlp_forward(x, prepared_params, output_dim, *, tile_b=512,
                vmem_budget_bytes=48 << 20):
    """x: (B, input_dim) float32. Returns (B, output_dim) float32."""
    B, din = x.shape
    din_pad = prepared_params[0][0].shape[0]
    dout_pad = prepared_params[-1][0].shape[1]
    num_linear = len(prepared_params)
    compute_dtype = prepared_params[0][0].dtype

    hidden_pads = [w.shape[1] for w, _ in prepared_params[:-1]]
    max_hidden_pad = max(hidden_pads) if hidden_pads else 128

    weight_bytes = sum(w.size * w.dtype.itemsize + b.size * b.dtype.itemsize
                       for w, b in prepared_params)

    # ---- batch tiling + explicit VMEM budget (v7x has only 64 MiB) ---------
    b_pad = _round_up(B, 8)
    tile_b = max(8, min(_round_up(tile_b, 8), b_pad))

    def _vmem_needed(tb):
        act_io = 2 * 2 * tb * max(din_pad, dout_pad) * 4   # dbl-buffered in+out
        scratch = tb * max_hidden_pad * 4
        return weight_bytes + act_io + scratch

    while tile_b > 8 and _vmem_needed(tile_b) > vmem_budget_bytes:
        tile_b = max(8, _round_up(tile_b // 2, 8))

    b_pad = _round_up(b_pad, tile_b)
    grid = (b_pad // tile_b,)

    # Pad input only if actually misaligned (avoids an extra HBM copy of x
    # per call when the caller already provides aligned activations).
    if (b_pad, din_pad) != (B, din):
        x_in = jnp.zeros((b_pad, din_pad), jnp.float32).at[:B, :din].set(x)
    else:
        x_in = x.astype(jnp.float32)

    flat_args = []
    in_specs = [pl.BlockSpec((tile_b, din_pad), lambda i: (i, 0))]
    for w_t, b_v in prepared_params:
        flat_args.append(w_t)
        flat_args.append(b_v)
        # Weights/biases: constant block index -> VMEM-resident across tiles.
        in_specs.append(pl.BlockSpec(w_t.shape, lambda i: (0, 0)))
        in_specs.append(pl.BlockSpec(b_v.shape, lambda i: (0, 0)))

    vmem_limit = int(min(max(2 * _vmem_needed(tile_b), 16 << 20), 64 << 20))

    out_pad = pl.pallas_call(
        _make_mlp_kernel(num_linear, compute_dtype),
        out_shape=jax.ShapeDtypeStruct((b_pad, dout_pad), jnp.float32),
        grid=grid,
        in_specs=in_specs,
        out_specs=pl.BlockSpec((tile_b, dout_pad), lambda i: (i, 0)),
        scratch_shapes=[pltpu.VMEM((tile_b, max_hidden_pad), jnp.float32)],
        compiler_params=pltpu.CompilerParams(
            dimension_semantics=("parallel",),   # megacore sharding on v7x
            vmem_limit_bytes=vmem_limit,
        ),
    )(x_in, *flat_args)

    return out_pad[:B, :output_dim]


# ---------------------------------------------------------------------------
# Pure-JAX reference (unpadded, f32, PyTorch-layout params)
# ---------------------------------------------------------------------------
def reference_forward(x, params):
    h = x
    n = len(params)
    for i, (w, b) in enumerate(params):
        h = h @ w.T + b
        if i < n - 1:
            h = jax.nn.relu(h)
    return h


# ---------------------------------------------------------------------------
# Main
# ---------------------------------------------------------------------------
if __name__ == "__main__":
    input_dim, hidden_dims, output_dim = 16, [32, 32], 4
    B = 2

    key = jax.random.PRNGKey(0)
    dims = [input_dim] + list(hidden_dims) + [output_dim]
    num_linear = len(dims) - 1
    keys = jax.random.split(key, 2 * num_linear + 1)

    # PyTorch nn.Linear default init: U(-1/sqrt(fan_in), 1/sqrt(fan_in)).
    params = []
    ki = 0
    for l in range(num_linear):
        fan_in, fan_out = dims[l], dims[l + 1]
        bound = 1.0 / (fan_in ** 0.5)
        w = jax.random.uniform(keys[ki], (fan_out, fan_in),
                               minval=-bound, maxval=bound,
                               dtype=jnp.float32); ki += 1
        b = jax.random.uniform(keys[ki], (fan_out,),
                               minval=-bound, maxval=bound,
                               dtype=jnp.float32); ki += 1
        params.append((w, b))

    x = jax.random.normal(keys[ki], (B, input_dim), dtype=jnp.float32)

    prepared = prepare_params(params)                 # bf16 weights, f32 bias
    out = mlp_forward(x, prepared, output_dim)
    out = jax.block_until_ready(out)

    ref = reference_forward(x, params)                # f32 reference
    assert out.shape == (B, output_dim), out.shape
    # bf16 MXU operands with f32 accumulation -> loose tolerance vs f32 ref.
    assert jnp.allclose(out, ref, atol=5e-2, rtol=5e-2), \
        float(jnp.max(jnp.abs(out - ref)))

    print("KERNEL_OK")
</pallas_src>

<mosaic_0001>
module attributes {stable_mosaic.version = 11 : i64} {
  func.func @kernel(%arg0: i32, %arg1: memref<8x128xf32, #tpu.memory_space<vmem>>, %arg2: memref<128x128xbf16, #tpu.memory_space<vmem>>, %arg3: memref<1x128xf32, #tpu.memory_space<vmem>>, %arg4: memref<128x128xbf16, #tpu.memory_space<vmem>>, %arg5: memref<1x128xf32, #tpu.memory_space<vmem>>, %arg6: memref<128x128xbf16, #tpu.memory_space<vmem>>, %arg7: memref<1x128xf32, #tpu.memory_space<vmem>>, %arg8: memref<8x128xf32, #tpu.memory_space<vmem>>, %arg9: memref<8x128xf32, #tpu.memory_space<vmem>>) attributes {dimension_semantics = [#tpu.dimension_semantics<parallel>], iteration_bounds = array<i64: 1>, scalar_prefetch = 0 : i64, scratch_operands = 1 : i64, tpu.core_type = #tpu.core_type<tc>, window_params = [{transform_indices = @transform_0, window_bounds = array<i64: 8, 128>}, {pipeline_mode = #tpu.pipeline_mode<synchronous>, transform_indices = @transform_1, window_bounds = array<i64: 128, 128>}, {pipeline_mode = #tpu.pipeline_mode<synchronous>, transform_indices = @transform_2, window_bounds = array<i64: 1, 128>}, {pipeline_mode = #tpu.pipeline_mode<synchronous>, transform_indices = @transform_3, window_bounds = array<i64: 128, 128>}, {pipeline_mode = #tpu.pipeline_mode<synchronous>, transform_indices = @transform_4, window_bounds = array<i64: 1, 128>}, {pipeline_mode = #tpu.pipeline_mode<synchronous>, transform_indices = @transform_5, window_bounds = array<i64: 128, 128>}, {pipeline_mode = #tpu.pipeline_mode<synchronous>, transform_indices = @transform_6, window_bounds = array<i64: 1, 128>}, {transform_indices = @transform_7, window_bounds = array<i64: 8, 128>}]} {
    %c0 = arith.constant 0 : index
    %c0_0 = arith.constant 0 : index
    %0 = vector.load %arg1[%c0, %c0_0] : memref<8x128xf32, #tpu.memory_space<vmem>>, vector<8x128xf32>
    %c0_1 = arith.constant 0 : index
    %c0_2 = arith.constant 0 : index
    %1 = vector.load %arg2[%c0_1, %c0_2] : memref<128x128xbf16, #tpu.memory_space<vmem>>, vector<128x128xbf16>
    %c0_3 = arith.constant 0 : index
    %c0_4 = arith.constant 0 : index
    %2 = vector.load %arg3[%c0_3, %c0_4] : memref<1x128xf32, #tpu.memory_space<vmem>>, vector<1x128xf32>
    %3 = arith.truncf %0 : vector<8x128xf32> to vector<8x128xbf16>
    %cst = arith.constant dense<0.000000e+00> : vector<8x128xf32>
    %4 = tpu.matmul %3, %1, %cst {dimension_numbers = #tpu.dot_dimension_numbers<[1], [0], [0], [1], [0, 0, 1, 1], [], []>} : vector<8x128xbf16>, vector<128x128xbf16>, vector<8x128xf32> -> vector<8x128xf32>
    %5 = vector.broadcast %2 : vector<1x128xf32> to vector<8x128xf32>
    %6 = arith.addf %4, %5 : vector<8x128xf32>
    %cst_5 = arith.constant 0.000000e+00 : f32
    %7 = vector.broadcast %cst_5 : f32 to vector<8x128xf32>
    %8 = arith.maximumf %6, %7 : vector<8x128xf32>
    %c0_6 = arith.constant 0 : index
    %c0_7 = arith.constant 0 : index
    %9 = vector.load %arg9[%c0_6, %c0_7] : memref<8x128xf32, #tpu.memory_space<vmem>>, vector<8x128xf32>
    tpu.vector_store %arg9[%c0_6, %c0_7], %8 {strides = array<i32>} : memref<8x128xf32, #tpu.memory_space<vmem>>, vector<8x128xf32>,
    %c0_8 = arith.constant 0 : index
    %c0_9 = arith.constant 0 : index
    %10 = vector.load %arg9[%c0_8, %c0_9] : memref<8x128xf32, #tpu.memory_space<vmem>>, vector<8x128xf32>
    %c0_10 = arith.constant 0 : index
    %c0_11 = arith.constant 0 : index
    %11 = vector.load %arg4[%c0_10, %c0_11] : memref<128x128xbf16, #tpu.memory_space<vmem>>, vector<128x128xbf16>
    %c0_12 = arith.constant 0 : index
    %c0_13 = arith.constant 0 : index
    %12 = vector.load %arg5[%c0_12, %c0_13] : memref<1x128xf32, #tpu.memory_space<vmem>>, vector<1x128xf32>
    %13 = arith.truncf %10 : vector<8x128xf32> to vector<8x128xbf16>
    %cst_14 = arith.constant dense<0.000000e+00> : vector<8x128xf32>
    %14 = tpu.matmul %13, %11, %cst_14 {dimension_numbers = #tpu.dot_dimension_numbers<[1], [0], [0], [1], [0, 0, 1, 1], [], []>} : vector<8x128xbf16>, vector<128x128xbf16>, vector<8x128xf32> -> vector<8x128xf32>
    %15 = vector.broadcast %12 : vector<1x128xf32> to vector<8x128xf32>
    %16 = arith.addf %14, %15 : vector<8x128xf32>
    %cst_15 = arith.constant 0.000000e+00 : f32
    %17 = vector.broadcast %cst_15 : f32 to vector<8x128xf32>
    %18 = arith.maximumf %16, %17 : vector<8x128xf32>
    %c0_16 = arith.constant 0 : index
    %c0_17 = arith.constant 0 : index
    %19 = vector.load %arg9[%c0_16, %c0_17] : memref<8x128xf32, #tpu.memory_space<vmem>>, vector<8x128xf32>
    tpu.vector_store %arg9[%c0_16, %c0_17], %18 {strides = array<i32>} : memref<8x128xf32, #tpu.memory_space<vmem>>, vector<8x128xf32>,
    %c0_18 = arith.constant 0 : index
    %c0_19 = arith.constant 0 : index
    %20 = vector.load %arg9[%c0_18, %c0_19] : memref<8x128xf32, #tpu.memory_space<vmem>>, vector<8x128xf32>
    %c0_20 = arith.constant 0 : index
    %c0_21 = arith.constant 0 : index
    %21 = vector.load %arg6[%c0_20, %c0_21] : memref<128x128xbf16, #tpu.memory_space<vmem>>, vector<128x128xbf16>
    %c0_22 = arith.constant 0 : index
    %c0_23 = arith.constant 0 : index
    %22 = vector.load %arg7[%c0_22, %c0_23] : memref<1x128xf32, #tpu.memory_space<vmem>>, vector<1x128xf32>
    %23 = arith.truncf %20 : vector<8x128xf32> to vector<8x128xbf16>
    %cst_24 = arith.constant dense<0.000000e+00> : vector<8x128xf32>
    %24 = tpu.matmul %23, %21, %cst_24 {dimension_numbers = #tpu.dot_dimension_numbers<[1], [0], [0], [1], [0, 0, 1, 1], [], []>} : vector<8x128xbf16>, vector<128x128xbf16>, vector<8x128xf32> -> vector<8x128xf32>
    %25 = vector.broadcast %22 : vector<1x128xf32> to vector<8x128xf32>
    %26 = arith.addf %24, %25 : vector<8x128xf32>
    %c0_25 = arith.constant 0 : index
    %c0_26 = arith.constant 0 : index
    %27 = vector.load %arg8[%c0_25, %c0_26] : memref<8x128xf32, #tpu.memory_space<vmem>>, vector<8x128xf32>
    tpu.vector_store %arg8[%c0_25, %c0_26], %26 {strides = array<i32>} : memref<8x128xf32, #tpu.memory_space<vmem>>, vector<8x128xf32>,
    return
  }
  func.func @transform_0(%arg0: i32) -> (i32, i32) {
    %c0_i32 = arith.constant 0 : i32
    %c0_i32_0 = arith.constant 0 : i32
    return %arg0, %c0_i32 : i32, i32
  }
  func.func @transform_1(%arg0: i32) -> (i32, i32) {
    %c0_i32 = arith.constant 0 : i32
    %c0_i32_0 = arith.constant 0 : i32
    %c0_i32_1 = arith.constant 0 : i32
    return %c0_i32, %c0_i32_0 : i32, i32
  }
  func.func @transform_2(%arg0: i32) -> (i32, i32) {
    %c0_i32 = arith.constant 0 : i32
    %c0_i32_0 = arith.constant 0 : i32
    %c0_i32_1 = arith.constant 0 : i32
    return %c0_i32, %c0_i32_0 : i32, i32
  }
  func.func @transform_3(%arg0: i32) -> (i32, i32) {
    %c0_i32 = arith.constant 0 : i32
    %c0_i32_0 = arith.constant 0 : i32
    %c0_i32_1 = arith.constant 0 : i32
    return %c0_i32, %c0_i32_0 : i32, i32
  }
  func.func @transform_4(%arg0: i32) -> (i32, i32) {
    %c0_i32 = arith.constant 0 : i32
    %c0_i32_0 = arith.constant 0 : i32
    %c0_i32_1 = arith.constant 0 : i32
    return %c0_i32, %c0_i32_0 : i32, i32
  }
  func.func @transform_5(%arg0: i32) -> (i32, i32) {
    %c0_i32 = arith.constant 0 : i32
    %c0_i32_0 = arith.constant 0 : i32
    %c0_i32_1 = arith.constant 0 : i32
    return %c0_i32, %c0_i32_0 : i32, i32
  }
  func.func @transform_6(%arg0: i32) -> (i32, i32) {
    %c0_i32 = arith.constant 0 : i32
    %c0_i32_0 = arith.constant 0 : i32
    %c0_i32_1 = arith.constant 0 : i32
    return %c0_i32, %c0_i32_0 : i32, i32
  }
  func.func @transform_7(%arg0: i32) -> (i32, i32) {
    %c0_i32 = arith.constant 0 : i32
    %c0_i32_0 = arith.constant 0 : i32
    return %arg0, %c0_i32 : i32, i32
  }
}

</mosaic_0001>

<llo_original>
// kernel: tpu_custom_call.1
$region0: #{tpu_custom_call.1}
  #allocation0 [shape = 'u32[]', space=smem, size = 0x4, offset = 0x4, fixed_abs, tag = 'smem constant byte address 0x4 - core index']
  #allocation1 [shape = 'u32[144,128]{1,0:T(1,128)}', space=vmem, size = 0x12000, scoped, tag = 'internal scratch']
  #allocation2 [shape = 'f32[8,128]{1,0:T(8,128)}', space=vmem, size = 0x1000, scoped, tag = 'scratch operand']
  %s0 = inlined_call_operand.hbm [shape: f32[8,128], index: 0, kind: input, shape index: {}]
  %s1 = inlined_call_operand.hbm [shape: bf16[128,128], index: 1, kind: input, shape index: {}]
  %s2 = inlined_call_operand.vmem [shape: f32[1,128], index: 2, kind: input, shape index: {}]
  %s3 = inlined_call_operand.hbm [shape: bf16[128,128], index: 3, kind: input, shape index: {}]
  %s4 = inlined_call_operand.vmem [shape: f32[1,128], index: 4, kind: input, shape index: {}]
  %s5 = inlined_call_operand.hbm [shape: bf16[128,128], index: 5, kind: input, shape index: {}]
  %s6 = inlined_call_operand.vmem [shape: f32[1,128], index: 6, kind: input, shape index: {}]
  %s7 = inlined_call_operand.hbm [shape: f32[8,128], index: 7, kind: output, shape index: {}]
  %s8 = sld [smem:[#allocation0]]
  $region54: #{tpu_custom_call.1} parent=0
    _
  %s10 = ssub.s32 1, %s8
  %s11 = scalar_select 0, %s10, %s8
  $region1: #{tpu_custom_call.1} parent=0
    #allocation3 [shape = 'u8[4096]{0}', space=vmem, size = 0x1000, scoped, tag = 'input window, operand 0, single buffered']
    #allocation4 [shape = 's32[1]{0}', space=sflag, size = 0x4, scoped, tag = 'scoped memory for tpu_custom_call.1']
    #allocation5 [shape = 's32[1]{0}', space=sflag, size = 0x4, scoped, tag = 'scoped memory for tpu_custom_call.1']
    #allocation6 [shape = 'u8[32768]{0}', space=vmem, size = 0x8000, scoped, tag = 'input window, operand 1, single buffered']
    #allocation7 [shape = 's32[1]{0}', space=sflag, size = 0x4, scoped, tag = 'scoped memory for tpu_custom_call.1']
    #allocation8 [shape = 'u8[32768]{0}', space=vmem, size = 0x8000, scoped, tag = 'input window, operand 3, single buffered']
    #allocation9 [shape = 'u8[32768]{0}', space=vmem, size = 0x8000, scoped, tag = 'input window, operand 5, single buffered']
    #allocation10 [shape = 's32[1]{0}', space=sflag, size = 0x4, scoped, tag = 'scoped memory for tpu_custom_call.1']
    #allocation11 [shape = 'u8[4096]{0}', space=vmem, size = 0x1000, scoped, tag = 'output window, operand 0, single buffered']
    %12 = vsyncpa [#allocation4], 0
    %13 = vsyncpa [#allocation7], 0
    %14 = vsyncpa [#allocation10], 0
    %15 = vsyncpa [#allocation5], 0
    // Predicated region
    $region2: #{tpu_custom_call.1} parent=1 // pred_check
      _
    $region3: #{tpu_custom_call.1} parent=1 // pred_check_branch
      %17 = sbr.rel (0) target = $region5
    $region4: #{tpu_custom_call.1} parent=1 // pred_region
      %s19 = ssub.s32 128, 128
      %20 = vsyncadd [#allocation4], %s19
      %s22 = sshll.u32 [#allocation3], 4
      %s23 = int_to_ptr.vmem [resolvable:$true] %s22
      %25 = dma.hbm_to_vmem [thread:$0]  %s0, 128, %s23, [#allocation4]
    $region5: #{tpu_custom_call.1} parent=1 // pred_fallthru
      _
    // Predicated region
    $region6: #{tpu_custom_call.1} parent=1 // pred_check
      _
    $region7: #{tpu_custom_call.1} parent=1 // pred_check_branch
      %27 = sbr.rel (0) target = $region9
    $region8: #{tpu_custom_call.1} parent=1 // pred_region
      %s29 = ssub.s32 1024, 1024
      %30 = vsyncadd [#allocation7], %s29
      %s31 = sshll.u32 [#allocation6], 4
      %s32 = int_to_ptr.vmem [resolvable:$true] %s31
      %37 = dma.hbm_to_vmem [thread:$0]  %s1, 1024, %s32, [#allocation7], 64, 64, 4
    $region9: #{tpu_custom_call.1} parent=1 // pred_fallthru
      _
    // Predicated region
    $region10: #{tpu_custom_call.1} parent=1 // pred_check
      _
    $region11: #{tpu_custom_call.1} parent=1 // pred_check_branch
      %39 = sbr.rel (0) target = $region13
    $region12: #{tpu_custom_call.1} parent=1 // pred_region
      _
    $region13: #{tpu_custom_call.1} parent=1 // pred_fallthru
      _
    // Predicated region
    $region14: #{tpu_custom_call.1} parent=1 // pred_check
      _
    $region15: #{tpu_custom_call.1} parent=1 // pred_check_branch
      %41 = sbr.rel (0) target = $region17
    $region16: #{tpu_custom_call.1} parent=1 // pred_region
      %s43 = ssub.s32 1024, 1024
      %44 = vsyncadd [#allocation7], %s43
      %s45 = sshll.u32 [#allocation8], 4
      %s46 = int_to_ptr.vmem [resolvable:$true] %s45
      %51 = dma.hbm_to_vmem [thread:$0]  %s3, 1024, %s46, [#allocation7], 64, 64, 4
    $region17: #{tpu_custom_call.1} parent=1 // pred_fallthru
      _
    // Predicated region
    $region18: #{tpu_custom_call.1} parent=1 // pred_check
      _
    $region19: #{tpu_custom_call.1} parent=1 // pred_check_branch
      %53 = sbr.rel (0) target = $region21
    $region20: #{tpu_custom_call.1} parent=1 // pred_region
      _
    $region21: #{tpu_custom_call.1} parent=1 // pred_fallthru
      _
    // Predicated region
    $region22: #{tpu_custom_call.1} parent=1 // pred_check
      _
    $region23: #{tpu_custom_call.1} parent=1 // pred_check_branch
      %55 = sbr.rel (0) target = $region25
    $region24: #{tpu_custom_call.1} parent=1 // pred_region
      %s57 = ssub.s32 1024, 1024
      %58 = vsyncadd [#allocation10], %s57
      %s59 = sshll.u32 [#allocation9], 4
      %s60 = int_to_ptr.vmem [resolvable:$true] %s59
      %65 = dma.hbm_to_vmem [thread:$0]  %s5, 1024, %s60, [#allocation10], 64, 64, 4
    $region25: #{tpu_custom_call.1} parent=1 // pred_fallthru
      _
    // Predicated region
    $region26: #{tpu_custom_call.1} parent=1 // pred_check
      _
    $region27: #{tpu_custom_call.1} parent=1 // pred_check_branch
      %67 = sbr.rel (0) target = $region29
    $region28: #{tpu_custom_call.1} parent=1 // pred_region
      _
    $region29: #{tpu_custom_call.1} parent=1 // pred_fallthru
      _
    // Predicated region
    $region30: #{tpu_custom_call.1} parent=1 // pred_check
      _
    $region31: #{tpu_custom_call.1} parent=1 // pred_check_branch
      %69 = sbr.rel (0) target = $region33
    $region32: #{tpu_custom_call.1} parent=1 // pred_region
      %70 = dma.done [#allocation4], 128
    $region33: #{tpu_custom_call.1} parent=1 // pred_fallthru
      _
    // Predicated region
    $region34: #{tpu_custom_call.1} parent=1 // pred_check
      _
    $region35: #{tpu_custom_call.1} parent=1 // pred_check_branch
      %72 = sbr.rel (0) target = $region37
    $region36: #{tpu_custom_call.1} parent=1 // pred_region
      %73 = dma.done [#allocation7], 1024
    $region37: #{tpu_custom_call.1} parent=1 // pred_fallthru
      _
    // Predicated region
    $region38: #{tpu_custom_call.1} parent=1 // pred_check
      _
    $region39: #{tpu_custom_call.1} parent=1 // pred_check_branch
      %75 = sbr.rel (0) target = $region41
    $region40: #{tpu_custom_call.1} parent=1 // pred_region
      %76 = dma.done [#allocation7], 1024
    $region41: #{tpu_custom_call.1} parent=1 // pred_fallthru
      _
    // Predicated region
    $region42: #{tpu_custom_call.1} parent=1 // pred_check
      _
    $region43: #{tpu_custom_call.1} parent=1 // pred_check_branch
      %78 = sbr.rel (0) target = $region45
    $region44: #{tpu_custom_call.1} parent=1 // pred_region
      %79 = dma.done [#allocation10], 1024
    $region45: #{tpu_custom_call.1} parent=1 // pred_fallthru
      _
    %v81 = vld [vmem:[#allocation3] sm:$0xff]
    %v82 = vld [vmem:[#allocation6] sm:$0xf]
    %v83 = vld [vmem:[#allocation6 + $0x4] sm:$0xf]
    %v84 = vld [vmem:[#allocation6 + $0x8] sm:$0xf]
    %v85 = vld [vmem:[#allocation6 + $0xc] sm:$0xf]
    %v86 = vld [vmem:[#allocation6 + $0x10] sm:$0xf]
    %v87 = vld [vmem:[#allocation6 + $0x14] sm:$0xf]
    %v88 = vld [vmem:[#allocation6 + $0x18] sm:$0xf]
    %v89 = vld [vmem:[#allocation6 + $0x1c] sm:$0xf]
    %v90 = vld [vmem:[#allocation6 + $0x20] sm:$0xf]
    %v91 = vld [vmem:[#allocation6 + $0x24] sm:$0xf]
    %v92 = vld [vmem:[#allocation6 + $0x28] sm:$0xf]
    %v93 = vld [vmem:[#allocation6 + $0x2c] sm:$0xf]
    %v94 = vld [vmem:[#allocation6 + $0x30] sm:$0xf]
    %v95 = vld [vmem:[#allocation6 + $0x34] sm:$0xf]
    %v96 = vld [vmem:[#allocation6 + $0x38] sm:$0xf]
    %v97 = vld [vmem:[#allocation6 + $0x3c] sm:$0xf]
    %v98 = vld [vmem:[%s2] sm:$0x1]
    %v99 = vpack.c.bf16 %v81, %v81
    %v101 = vlaneseq
    %v102 = vshrl.u32 %v101, 7
    %v103 = vsub.s32 0, %v102
    %v104 = vrot.slane %v98, %v103
    %v122 = vunpack.c.l.b16 %v82
    %v123 = vunpack.c.l.b16 %v83
    %v124 = vunpack.c.l.b16 %v84
    %v125 = vunpack.c.l.b16 %v85
    %v126 = vunpack.c.l.b16 %v86
    %v127 = vunpack.c.l.b16 %v87
    %v128 = vunpack.c.l.b16 %v88
    %v129 = vunpack.c.l.b16 %v89
    %v130 = vunpack.c.l.b16 %v90
    %v131 = vunpack.c.l.b16 %v91
    %v132 = vunpack.c.l.b16 %v92
    %v133 = vunpack.c.l.b16 %v93
    %v134 = vunpack.c.l.b16 %v94
    %v135 = vunpack.c.l.b16 %v95
    %v136 = vunpack.c.l.b16 %v96
    %v137 = vunpack.c.l.b16 %v97
    %v138 = vpack.c.b16 %v123, %v122
    %v139 = vpack.c.b16 %v125, %v124
    %v140 = vpack.c.b16 %v127, %v126
    %v141 = vpack.c.b16 %v129, %v128
    %v142 = vpack.c.b16 %v131, %v130
    %v143 = vpack.c.b16 %v133, %v132
    %v144 = vpack.c.b16 %v135, %v134
    %v145 = vpack.c.b16 %v137, %v136
    %154 = vmatprep.subr.bf16.mxu0 0
    %155 = vmatpush1.bf16.msra.mxu0 %v145
    %156 = vmatprep.subr.bf16.mxu0 0
    %157 = vmatpush1.bf16.msra.mxu0 %v144
    %158 = vmatprep.subr.bf16.mxu0 0
    %159 = vmatpush1.bf16.msra.mxu0 %v143
    %160 = vmatprep.subr.bf16.mxu0 0
    %161 = vmatpush1.bf16.msra.mxu0 %v142
    %162 = vmatprep.subr.bf16.mxu0 0
    %163 = vmatpush1.bf16.msra.mxu0 %v141
    %164 = vmatprep.subr.bf16.mxu0 0
    %165 = vmatpush1.bf16.msra.mxu0 %v140
    %166 = vmatprep.subr.bf16.mxu0 0
    %167 = vmatpush1.bf16.msra.mxu0 %v139
    %168 = vmatprep.subr.bf16.mxu0 0
    %169 = vmatpush1.bf16.msra.mxu0 %v138
    %170 = vmatprep.subr.bf16.mxu0 0
    %171 = vmatpush2.bf16.msra.mxu0 0
    %172 = vmatprep.subr.bf16.mxu0 0
    %173 = vmatpush2.bf16.msra.mxu0 0
    %174 = vmatprep.subr.bf16.mxu0 0
    %175 = vmatpush2.bf16.msra.mxu0 0
    %176 = vmatprep.subr.bf16.mxu0 0
    %177 = vmatpush2.bf16.msra.mxu0 0
    %178 = vmatprep.subr.bf16.mxu0 0
    %179 = vmatpush2.bf16.msra.mxu0 0
    %180 = vmatprep.subr.bf16.mxu0 0
    %181 = vmatpush2.bf16.msra.mxu0 0
    %182 = vmatprep.subr.bf16.mxu0 0
    %183 = vmatpush2.bf16.msra.mxu0 0
    %184 = vmatprep.subr.bf16.mxu0 0
    %185 = vmatpush2.bf16.msra.mxu0 0
    %186 = vmatprep.mubr.bf16.mxu0 0
    %187 = vmatmul.mubr.bf16.gmra.mxu0 %v99
    %v188 = vpop.f32.mrf.mxu0
    %v189 = vadd.f32 %v104, %v188
    %v190 = vpop.f32.mrf.mxu0
    %v191 = vpop.f32.mrf.mxu0
    %v192 = vpop.f32.mrf.mxu0
    %193 = vdwg.mxu0
    %v194 = vmax.f32 %v189, 0.0
    %195 = vst [vmem:[#allocation2] sm:$0xff] %v194
    %v196 = vld [vmem:[#allocation2] sm:$0xff]
    %v197 = vld [vmem:[#allocation8] sm:$0xf]
    %v198 = vld [vmem:[#allocation8 + $0x4] sm:$0xf]
    %v199 = vld [vmem:[#allocation8 + $0x8] sm:$0xf]
    %v200 = vld [vmem:[#allocation8 + $0xc] sm:$0xf]
    %v201 = vld [vmem:[#allocation8 + $0x10] sm:$0xf]
    %v202 = vld [vmem:[#allocation8 + $0x14] sm:$0xf]
    %v203 = vld [vmem:[#allocation8 + $0x18] sm:$0xf]
    %v204 = vld [vmem:[#allocation8 + $0x1c] sm:$0xf]
    %v205 = vld [vmem:[#allocation8 + $0x20] sm:$0xf]
    %v206 = vld [vmem:[#allocation8 + $0x24] sm:$0xf]
    %v207 = vld [vmem:[#allocation8 + $0x28] sm:$0xf]
    %v208 = vld [vmem:[#allocation8 + $0x2c] sm:$0xf]
    %v209 = vld [vmem:[#allocation8 + $0x30] sm:$0xf]
    %v210 = vld [vmem:[#allocation8 + $0x34] sm:$0xf]
    %v211 = vld [vmem:[#allocation8 + $0x38] sm:$0xf]
    %v212 = vld [vmem:[#allocation8 + $0x3c] sm:$0xf]
    %v213 = vld [vmem:[%s4] sm:$0x1]
    %v214 = vpack.c.bf16 %v196, %v196
    %v216 = vlaneseq
    %v217 = vshrl.u32 %v216, 7
    %v218 = vsub.s32 0, %v217
    %v219 = vrot.slane %v213, %v218
    %v237 = vunpack.c.l.b16 %v197
    %v238 = vunpack.c.l.b16 %v198
    %v239 = vunpack.c.l.b16 %v199
    %v240 = vunpack.c.l.b16 %v200
    %v241 = vunpack.c.l.b16 %v201
    %v242 = vunpack.c.l.b16 %v202
    %v243 = vunpack.c.l.b16 %v203
    %v244 = vunpack.c.l.b16 %v204
    %v245 = vunpack.c.l.b16 %v205
    %v246 = vunpack.c.l.b16 %v206
    %v247 = vunpack.c.l.b16 %v207
    %v248 = vunpack.c.l.b16 %v208
    %v249 = vunpack.c.l.b16 %v209
    %v250 = vunpack.c.l.b16 %v210
    %v251 = vunpack.c.l.b16 %v211
    %v252 = vunpack.c.l.b16 %v212
    %v253 = vpack.c.b16 %v238, %v237
    %v254 = vpack.c.b16 %v240, %v239
    %v255 = vpack.c.b16 %v242, %v241
    %v256 = vpack.c.b16 %v244, %v243
    %v257 = vpack.c.b16 %v246, %v245
    %v258 = vpack.c.b16 %v248, %v247
    %v259 = vpack.c.b16 %v250, %v249
    %v260 = vpack.c.b16 %v252, %v251
    %269 = vmatprep.subr.bf16.mxu0 0
    %270 = vmatpush1.bf16.msra.mxu0 %v260
    %271 = vmatprep.subr.bf16.mxu0 0
    %272 = vmatpush1.bf16.msra.mxu0 %v259
    %273 = vmatprep.subr.bf16.mxu0 0
    %274 = vmatpush1.bf16.msra.mxu0 %v258
    %275 = vmatprep.subr.bf16.mxu0 0
    %276 = vmatpush1.bf16.msra.mxu0 %v257
    %277 = vmatprep.subr.bf16.mxu0 0
    %278 = vmatpush1.bf16.msra.mxu0 %v256
    %279 = vmatprep.subr.bf16.mxu0 0
    %280 = vmatpush1.bf16.msra.mxu0 %v255
    %281 = vmatprep.subr.bf16.mxu0 0
    %282 = vmatpush1.bf16.msra.mxu0 %v254
    %283 = vmatprep.subr.bf16.mxu0 0
    %284 = vmatpush1.bf16.msra.mxu0 %v253
    %285 = vmatprep.subr.bf16.mxu0 0
    %286 = vmatpush2.bf16.msra.mxu0 0
    %287 = vmatprep.subr.bf16.mxu0 0
    %288 = vmatpush2.bf16.msra.mxu0 0
    %289 = vmatprep.subr.bf16.mxu0 0
    %290 = vmatpush2.bf16.msra.mxu0 0
    %291 = vmatprep.subr.bf16.mxu0 0
    %292 = vmatpush2.bf16.msra.mxu0 0
    %293 = vmatprep.subr.bf16.mxu0 0
    %294 = vmatpush2.bf16.msra.mxu0 0
    %295 = vmatprep.subr.bf16.mxu0 0
    %296 = vmatpush2.bf16.msra.mxu0 0
    %297 = vmatprep.subr.bf16.mxu0 0
    %298 = vmatpush2.bf16.msra.mxu0 0
    %299 = vmatprep.subr.bf16.mxu0 0
    %300 = vmatpush2.bf16.msra.mxu0 0
    %301 = vmatprep.mubr.bf16.mxu0 0
    %302 = vmatmul.mubr.bf16.gmra.mxu0 %v214
    %v303 = vpop.f32.mrf.mxu0
    %v304 = vadd.f32 %v219, %v303
    %v305 = vpop.f32.mrf.mxu0
    %v306 = vpop.f32.mrf.mxu0
    %v307 = vpop.f32.mrf.mxu0
    %308 = vdwg.mxu0
    %v309 = vmax.f32 %v304, 0.0
    %310 = vst [vmem:[#allocation2] sm:$0xff] %v309
    %v311 = vld [vmem:[#allocation2] sm:$0xff]
    %v312 = vld [vmem:[#allocation9] sm:$0xf]
    %v313 = vld [vmem:[#allocation9 + $0x4] sm:$0xf]
    %v314 = vld [vmem:[#allocation9 + $0x8] sm:$0xf]
    %v315 = vld [vmem:[#allocation9 + $0xc] sm:$0xf]
    %v316 = vld [vmem:[#allocation9 + $0x10] sm:$0xf]
    %v317 = vld [vmem:[#allocation9 + $0x14] sm:$0xf]
    %v318 = vld [vmem:[#allocation9 + $0x18] sm:$0xf]
    %v319 = vld [vmem:[#allocation9 + $0x1c] sm:$0xf]
    %v320 = vld [vmem:[#allocation9 + $0x20] sm:$0xf]
    %v321 = vld [vmem:[#allocation9 + $0x24] sm:$0xf]
    %v322 = vld [vmem:[#allocation9 + $0x28] sm:$0xf]
    %v323 = vld [vmem:[#allocation9 + $0x2c] sm:$0xf]
    %v324 = vld [vmem:[#allocation9 + $0x30] sm:$0xf]
    %v325 = vld [vmem:[#allocation9 + $0x34] sm:$0xf]
    %v326 = vld [vmem:[#allocation9 + $0x38] sm:$0xf]
    %v327 = vld [vmem:[#allocation9 + $0x3c] sm:$0xf]
    %v328 = vld [vmem:[%s6] sm:$0x1]
    %v329 = vpack.c.bf16 %v311, %v311
    %v331 = vlaneseq
    %v332 = vshrl.u32 %v331, 7
    %v333 = vsub.s32 0, %v332
    %v334 = vrot.slane %v328, %v333
    %v352 = vunpack.c.l.b16 %v312
    %v353 = vunpack.c.l.b16 %v313
    %v354 = vunpack.c.l.b16 %v314
    %v355 = vunpack.c.l.b16 %v315
    %v356 = vunpack.c.l.b16 %v316
    %v357 = vunpack.c.l.b16 %v317
    %v358 = vunpack.c.l.b16 %v318
    %v359 = vunpack.c.l.b16 %v319
    %v360 = vunpack.c.l.b16 %v320
    %v361 = vunpack.c.l.b16 %v321
    %v362 = vunpack.c.l.b16 %v322
    %v363 = vunpack.c.l.b16 %v323
    %v364 = vunpack.c.l.b16 %v324
    %v365 = vunpack.c.l.b16 %v325
    %v366 = vunpack.c.l.b16 %v326
    %v367 = vunpack.c.l.b16 %v327
    %v368 = vpack.c.b16 %v353, %v352
    %v369 = vpack.c.b16 %v355, %v354
    %v370 = vpack.c.b16 %v357, %v356
    %v371 = vpack.c.b16 %v359, %v358
    %v372 = vpack.c.b16 %v361, %v360
    %v373 = vpack.c.b16 %v363, %v362
    %v374 = vpack.c.b16 %v365, %v364
    %v375 = vpack.c.b16 %v367, %v366
    %384 = vmatprep.subr.bf16.mxu0 0
    %385 = vmatpush1.bf16.msra.mxu0 %v375
    %386 = vmatprep.subr.bf16.mxu0 0
    %387 = vmatpush1.bf16.msra.mxu0 %v374
    %388 = vmatprep.subr.bf16.mxu0 0
    %389 = vmatpush1.bf16.msra.mxu0 %v373
    %390 = vmatprep.subr.bf16.mxu0 0
    %391 = vmatpush1.bf16.msra.mxu0 %v372
    %392 = vmatprep.subr.bf16.mxu0 0
    %393 = vmatpush1.bf16.msra.mxu0 %v371
    %394 = vmatprep.subr.bf16.mxu0 0
    %395 = vmatpush1.bf16.msra.mxu0 %v370
    %396 = vmatprep.subr.bf16.mxu0 0
    %397 = vmatpush1.bf16.msra.mxu0 %v369
    %398 = vmatprep.subr.bf16.mxu0 0
    %399 = vmatpush1.bf16.msra.mxu0 %v368
    %400 = vmatprep.subr.bf16.mxu0 0
    %401 = vmatpush2.bf16.msra.mxu0 0
    %402 = vmatprep.subr.bf16.mxu0 0
    %403 = vmatpush2.bf16.msra.mxu0 0
    %404 = vmatprep.subr.bf16.mxu0 0
    %405 = vmatpush2.bf16.msra.mxu0 0
    %406 = vmatprep.subr.bf16.mxu0 0
    %407 = vmatpush2.bf16.msra.mxu0 0
    %408 = vmatprep.subr.bf16.mxu0 0
    %409 = vmatpush2.bf16.msra.mxu0 0
    %410 = vmatprep.subr.bf16.mxu0 0
    %411 = vmatpush2.bf16.msra.mxu0 0
    %412 = vmatprep.subr.bf16.mxu0 0
    %413 = vmatpush2.bf16.msra.mxu0 0
    %414 = vmatprep.subr.bf16.mxu0 0
    %415 = vmatpush2.bf16.msra.mxu0 0
    %416 = vmatprep.mubr.bf16.mxu0 0
    %417 = vmatmul.mubr.bf16.gmra.mxu0 %v329
    %v418 = vpop.f32.mrf.mxu0
    %v419 = vadd.f32 %v334, %v418
    %v420 = vpop.f32.mrf.mxu0
    %v421 = vpop.f32.mrf.mxu0
    %v422 = vpop.f32.mrf.mxu0
    %423 = vdwg.mxu0
    %424 = vst [vmem:[#allocation11] sm:$0xff] %v419
    // Predicated region
    $region46: #{tpu_custom_call.1} parent=1 // pred_check
      _
    $region47: #{tpu_custom_call.1} parent=1 // pred_check_branch
      %426 = sbr.rel (0) target = $region49
    $region48: #{tpu_custom_call.1} parent=1 // pred_region
      %s428 = ssub.s32 128, 128
      %429 = vsyncadd [#allocation5], %s428
      %s431 = sshll.u32 [#allocation11], 4
      %s432 = int_to_ptr.vmem [resolvable:$true] %s431
      %434 = dma.vmem_to_hbm [thread:$0]  %s432, 128, %s7, [#allocation5]
    $region49: #{tpu_custom_call.1} parent=1 // pred_fallthru
      _
    // Predicated region
    $region50: #{tpu_custom_call.1} parent=1 // pred_check
      _
    $region51: #{tpu_custom_call.1} parent=1 // pred_check_branch
      %436 = sbr.rel (0) target = $region53
    $region52: #{tpu_custom_call.1} parent=1 // pred_region
      %437 = dma.done [#allocation5], 128
    $region53: #{tpu_custom_call.1} parent=1 // pred_fallthru
      _
    %438 = vsyncpa [#allocation4], 1
    %439 = vsyncpa [#allocation7], 1
    %440 = vsyncpa [#allocation10], 1
    %441 = vsyncpa [#allocation5], 1

</llo_original>
